<compile_context>
chip_gen: v5e
topology: v5e:2x2
jax: 0.10.0
libtpu: 0.0.40
codegen_flags: <defaults>
</compile_context>

<pallas_src>
import functools

import jax
import jax.numpy as jnp
from jax.experimental import pallas as pl
from jax.experimental.pallas import tpu as pltpu


def _triplet_kernel(a_ref, p_ref, n_ref, hinge_ref, *, margin):
    a = a_ref[...].astype(jnp.float32)
    p = p_ref[...].astype(jnp.float32)
    n = n_ref[...].astype(jnp.float32)

    # (a - p)^2 - (a - n)^2 == (p - n) * (p + n - 2a)
    diff = (p - n) * (p + n - 2.0 * a)

    # Embedding-dim reduction on the MXU (vex slot) rather than the XLU:
    # (TB, D) @ (D, 1) -> (TB, 1).  HIGHEST precision keeps ~f32 accuracy.
    ones = jnp.ones((diff.shape[1], 1), dtype=jnp.float32)
    dist = jnp.dot(diff, ones,
                   preferred_element_type=jnp.float32,
                   precision=jax.lax.Precision.HIGHEST)
    dist = dist + jnp.float32(margin)

    hinge_ref[...] = jnp.maximum(dist, 0.0)


def _sublane_multiple(dtype):
    itemsize = jnp.dtype(dtype).itemsize
    if itemsize >= 4:
        return 8
    if itemsize == 2:
        return 16
    return 32


def _choose_block_rows(B, D, dtype):
    """Batch tile: dtype-aware sublane multiple, ~4 MiB per input block,
    and >=2 grid steps whenever B allows (pipelining + megacore sharding)."""
    sub = _sublane_multiple(dtype)
    itemsize = jnp.dtype(dtype).itemsize
    target_bytes = 4 * 1024 * 1024
    rows = max(sub, target_bytes // max(1, D * itemsize))
    rows = (rows // sub) * sub
    if rows >= B:
        if B > sub:
            # Split into (at least) two roughly equal, sublane-aligned tiles.
            rows = ((B + 1) // 2 + sub - 1) // sub * sub
        else:
            rows = B  # full array extent is always a legal block dim
    return rows


def triplet_loss_ip(anchor, positive, negative, margin, average=True,
                    block_rows=None):
    """Pallas implementation of TripletLossIP.forward."""
    B, D = anchor.shape
    itemsize = jnp.dtype(anchor.dtype).itemsize
    if block_rows is None:
        block_rows = _choose_block_rows(B, D, anchor.dtype)

    kernel = functools.partial(_triplet_kernel, margin=float(margin))
    grid = (pl.cdiv(B, block_rows),)

    in_spec = pl.BlockSpec((block_rows, D), lambda i: (i, 0))

    cost = pl.CostEstimate(
        flops=8 * B * D,
        transcendentals=0,
        bytes_accessed=3 * B * D * itemsize + B * 4,
    )

    hinge = pl.pallas_call(
        kernel,
        grid=grid,
        in_specs=[in_spec, in_spec, in_spec],
        out_specs=pl.BlockSpec((block_rows, 1), lambda i: (i, 0)),
        out_shape=jax.ShapeDtypeStruct((B, 1), jnp.float32),
        compiler_params=pltpu.CompilerParams(
            dimension_semantics=("parallel",),
            # 3 inputs x 2 pipeline buffers x ~4 MiB = ~24 MiB in flight;
            # 40 MiB scoped limit fits every generation (v7x physical = 64 MiB)
            # and covers v5e's 16 MiB default.
            vmem_limit_bytes=40 * 1024 * 1024,
        ),
        cost_estimate=cost,
    )(anchor, positive, negative)

    per_sample = hinge[:, 0]
    if average:
        # Mean over B floats: negligible work, kept outside the kernel so the
        # batch grid axis stays "parallel" with no cross-grid accumulator.
        return jnp.mean(per_sample)
    return per_sample


if __name__ == "__main__":
    key = jax.random.PRNGKey(0)
    k_a, k_p, k_n = jax.random.split(key, 3)

    # B deliberately not a multiple of the tile -> exercises the remainder tile.
    B, D = 20, 128
    margin = 0.5

    anchor = jax.random.normal(k_a, (B, D), dtype=jnp.float32)
    positive = jax.random.normal(k_p, (B, D), dtype=jnp.float32)
    negative = jax.random.normal(k_n, (B, D), dtype=jnp.float32)

    # plain-JAX reference
    dist_ref = jnp.sum((anchor - positive) ** 2 - (anchor - negative) ** 2,
                       axis=1) + margin
    hinge_ref = jnp.maximum(dist_ref, 0.0)

    # average=False path, explicit small tile -> 3 grid steps (incl. remainder)
    per_sample = jax.block_until_ready(
        triplet_loss_ip(anchor, positive, negative, margin, average=False,
                        block_rows=8))
    assert jnp.allclose(per_sample, hinge_ref, atol=1e-4, rtol=1e-4), \
        "per-sample mismatch"

    # average=True path, auto-sized tiles (>=2 grid steps with remainder)
    loss = jax.block_until_ready(
        triplet_loss_ip(anchor, positive, negative, margin, average=True))
    assert jnp.allclose(loss, jnp.mean(hinge_ref), atol=1e-4, rtol=1e-4), \
        "mean mismatch"

    # bf16 inputs (half the HBM bytes; kernel still accumulates in f32) with
    # dtype-aware (multiple-of-16) tiling.
    a16 = anchor.astype(jnp.bfloat16)
    p16 = positive.astype(jnp.bfloat16)
    n16 = negative.astype(jnp.bfloat16)
    a32, p32, n32 = (x.astype(jnp.float32) for x in (a16, p16, n16))
    dist16_ref = jnp.sum((a32 - p32) ** 2 - (a32 - n32) ** 2, axis=1) + margin
    hinge16_ref = jnp.maximum(dist16_ref, 0.0)
    per16 = jax.block_until_ready(
        triplet_loss_ip(a16, p16, n16, margin, average=False))
    assert jnp.allclose(per16, hinge16_ref, atol=1e-3, rtol=1e-3), \
        "bf16 mismatch"

    print("KERNEL_OK")
</pallas_src>

<mosaic_0001>
module attributes {stable_mosaic.version = 11 : i64} {
  func.func @_triplet_kernel(%arg0: i32, %arg1: memref<8x128xf32, #tpu.memory_space<vmem>>, %arg2: memref<8x128xf32, #tpu.memory_space<vmem>>, %arg3: memref<8x128xf32, #tpu.memory_space<vmem>>, %arg4: memref<8x1xf32, #tpu.memory_space<vmem>>) attributes {dimension_semantics = [#tpu.dimension_semantics<parallel>], iteration_bounds = array<i64: 3>, scalar_prefetch = 0 : i64, scratch_operands = 0 : i64, tpu.core_type = #tpu.core_type<tc>, window_params = [{transform_indices = @transform_0, window_bounds = array<i64: 8, 128>}, {transform_indices = @transform_1, window_bounds = array<i64: 8, 128>}, {transform_indices = @transform_2, window_bounds = array<i64: 8, 128>}, {transform_indices = @transform_3, window_bounds = array<i64: 8, 1>}]} {
    %c0 = arith.constant 0 : index
    %c0_0 = arith.constant 0 : index
    %0 = vector.load %arg1[%c0, %c0_0] : memref<8x128xf32, #tpu.memory_space<vmem>>, vector<8x128xf32>
    %c0_1 = arith.constant 0 : index
    %c0_2 = arith.constant 0 : index
    %1 = vector.load %arg2[%c0_1, %c0_2] : memref<8x128xf32, #tpu.memory_space<vmem>>, vector<8x128xf32>
    %c0_3 = arith.constant 0 : index
    %c0_4 = arith.constant 0 : index
    %2 = vector.load %arg3[%c0_3, %c0_4] : memref<8x128xf32, #tpu.memory_space<vmem>>, vector<8x128xf32>
    %3 = arith.subf %1, %2 : vector<8x128xf32>
    %4 = arith.addf %1, %2 : vector<8x128xf32>
    %cst = arith.constant 2.000000e+00 : f32
    %5 = vector.broadcast %cst : f32 to vector<8x128xf32>
    %6 = arith.mulf %5, %0 : vector<8x128xf32>
    %7 = arith.subf %4, %6 : vector<8x128xf32>
    %8 = arith.mulf %3, %7 : vector<8x128xf32>
    %cst_5 = arith.constant 1.000000e+00 : f32
    %9 = vector.broadcast %cst_5 : f32 to vector<128x1xf32>
    %cst_6 = arith.constant dense<0.000000e+00> : vector<8x1xf32>
    %10 = tpu.matmul %8, %9, %cst_6 {dimension_numbers = #tpu.dot_dimension_numbers<[1], [0], [0], [1], [0, 0, 1, 1], [], []>, precision = #tpu.contract_precision<fp32>} : vector<8x128xf32>, vector<128x1xf32>, vector<8x1xf32> -> vector<8x1xf32>
    %cst_7 = arith.constant 5.000000e-01 : f32
    %11 = vector.broadcast %cst_7 : f32 to vector<8x1xf32>
    %12 = arith.addf %10, %11 : vector<8x1xf32>
    %cst_8 = arith.constant 0.000000e+00 : f32
    %13 = vector.broadcast %cst_8 : f32 to vector<8x1xf32>
    %14 = arith.maximumf %12, %13 : vector<8x1xf32>
    %c0_9 = arith.constant 0 : index
    %c0_10 = arith.constant 0 : index
    %15 = vector.load %arg4[%c0_9, %c0_10] : memref<8x1xf32, #tpu.memory_space<vmem>>, vector<8x1xf32>
    tpu.vector_store %arg4[%c0_9, %c0_10], %14 {strides = array<i32>} : memref<8x1xf32, #tpu.memory_space<vmem>>, vector<8x1xf32>,
    return
  }
  func.func @transform_0(%arg0: i32) -> (i32, i32) {
    %c0_i32 = arith.constant 0 : i32
    %c0_i32_0 = arith.constant 0 : i32
    return %arg0, %c0_i32 : i32, i32
  }
  func.func @transform_1(%arg0: i32) -> (i32, i32) {
    %c0_i32 = arith.constant 0 : i32
    %c0_i32_0 = arith.constant 0 : i32
    return %arg0, %c0_i32 : i32, i32
  }
  func.func @transform_2(%arg0: i32) -> (i32, i32) {
    %c0_i32 = arith.constant 0 : i32
    %c0_i32_0 = arith.constant 0 : i32
    return %arg0, %c0_i32 : i32, i32
  }
  func.func @transform_3(%arg0: i32) -> (i32, i32) {
    %c0_i32 = arith.constant 0 : i32
    %c0_i32_0 = arith.constant 0 : i32
    return %arg0, %c0_i32 : i32, i32
  }
}

</mosaic_0001>

<llo_original>
// kernel: tpu_custom_call.1
$region0: #{tpu_custom_call.1}
  #allocation0 [shape = 'u32[]', space=smem, size = 0x4, offset = 0x4, fixed_abs, tag = 'smem constant byte address 0x4 - core index']
  #allocation1 [shape = 'u32[72,128]{1,0:T(1,128)}', space=vmem, size = 0x9000, scoped, tag = 'internal scratch']
  %s0 = inlined_call_operand.hbm [shape: f32[20,128], index: 0, kind: input, shape index: {}]
  %s1 = inlined_call_operand.hbm [shape: f32[20,128], index: 1, kind: input, shape index: {}]
  %s2 = inlined_call_operand.hbm [shape: f32[20,128], index: 2, kind: input, shape index: {}]
  %s3 = inlined_call_operand.vmem [shape: f32[20,1], index: 3, kind: output, shape index: {}]
  %s4 = sld [smem:[#allocation0]]
  $region57: #{tpu_custom_call.1} parent=0
    _
  %s6 = ssub.s32 1, %s4
  %s7 = scalar_select 0, %s6, %s4
  $region1: #{tpu_custom_call.1} parent=0
    #allocation2 [shape = 'u8[8192]{0}', space=vmem, size = 0x2000, scoped, tag = 'input window, operand 0']
    #allocation3 [shape = 's32[2]{0}', space=sflag, size = 0x8, scoped, tag = 'scoped memory for tpu_custom_call.1']
    #allocation4 [shape = 'u8[8192]{0}', space=vmem, size = 0x2000, scoped, tag = 'input window, operand 1']
    #allocation5 [shape = 's32[2]{0}', space=sflag, size = 0x8, scoped, tag = 'scoped memory for tpu_custom_call.1']
    #allocation6 [shape = 'u8[8192]{0}', space=vmem, size = 0x2000, scoped, tag = 'input window, operand 2']
    %8 = vsyncpa [#allocation3], 0
    %s9 = scalar_lea.sflag [#allocation3], 1
    %10 = vsyncpa %s9, 0
    %11 = vsyncpa [#allocation5], 0
    %s12 = scalar_lea.sflag [#allocation5], 1
    %13 = vsyncpa %s12, 0
    loop: start=0, step=1, limit=5
    $region2: #{tpu_custom_call.1} parent=1 // loop_pre_header
      _
    $region3: #{tpu_custom_call.1} parent=1 // loop_header
      %s15 = sphi 0, %s19
      %p16 = scmp.ge.s32.totalorder %s15, 5
      %s25 = sphi 0, %s27
      %s28 = sphi 0, %s25
      %s29 = sphi 0, %s28
      %s45 = sphi 0, %s29
      %s51 = sphi 0, %s53
      %s54 = sphi 0, %s51
      %s55 = sphi 0, %s54
      %s71 = sphi 0, %s55
      %s77 = sphi 0, %s79
      %s80 = sphi 0, %s77
      %s81 = sphi 0, %s80
      %s97 = sphi 0, %s81
      %s103 = sphi 0, %s105
      %s106 = sphi 0, %s103
      %s107 = sphi 0, %s106
      %s123 = sphi 0, %s107
    $region4: #{tpu_custom_call.1} parent=1 // loop_header_branch
      %18 = sbr.rel (%p16) target = $region8
    $region5: #{tpu_custom_call.1} parent=1 // loop_body
      %s20 = ssub.s32 %s15, 1
      %s21 = ssub.s32 %s15, 2
      %s22 = sadd.s32 %s15, 1
      %s23 = ssub.s32 %s15, %s22
      %p24 = scmp.eq.s32.totalorder %s23, 0
      %s26 = sadd.s32 %s25, 1
      %s27 = scalar_select %p24, %s25, %s26
      %p30 = pneg %p24
      %p31 = scmp.eq.s32.totalorder %s15, 2
      %p32 = por %p30, %p31
      %p33 = scmp.ne.s32.totalorder %s25, %s28
      %p34 = scmp.eq.s32.totalorder %s15, 0
      %p35 = por %p33, %p34
      %p36 = scmp.ne.s32.totalorder %s25, %s28
      %p37 = scmp.eq.s32.totalorder %s20, 2
      %p38 = por %p36, %p37
      %p39 = scmp.ne.s32.totalorder %s28, %s29
      %p40 = scmp.eq.s32.totalorder %s20, 0
      %p41 = por %p39, %p40
      %p42 = scmp.ne.s32.totalorder %s28, %s29
      %p43 = scmp.eq.s32.totalorder %s21, 2
      %p44 = por %p42, %p43
      %p46 = scmp.ne.s32.totalorder %s29, %s45
      %p47 = scmp.eq.s32.totalorder %s21, 0
      %p48 = por %p46, %p47
      %s49 = ssub.s32 %s15, %s22
      %p50 = scmp.eq.s32.totalorder %s49, 0
      %s52 = sadd.s32 %s51, 1
      %s53 = scalar_select %p50, %s51, %s52
      %p56 = pneg %p50
      %p57 = scmp.eq.s32.totalorder %s15, 2
      %p58 = por %p56, %p57
      %p59 = scmp.ne.s32.totalorder %s51, %s54
      %p60 = scmp.eq.s32.totalorder %s15, 0
      %p61 = por %p59, %p60
      %p62 = scmp.ne.s32.totalorder %s51, %s54
      %p63 = scmp.eq.s32.totalorder %s20, 2
      %p64 = por %p62, %p63
      %p65 = scmp.ne.s32.totalorder %s54, %s55
      %p66 = scmp.eq.s32.totalorder %s20, 0
      %p67 = por %p65, %p66
      %p68 = scmp.ne.s32.totalorder %s54, %s55
      %p69 = scmp.eq.s32.totalorder %s21, 2
      %p70 = por %p68, %p69
      %p72 = scmp.ne.s32.totalorder %s55, %s71
      %p73 = scmp.eq.s32.totalorder %s21, 0
      %p74 = por %p72, %p73
      %s75 = ssub.s32 %s15, %s22
      %p76 = scmp.eq.s32.totalorder %s75, 0
      %s78 = sadd.s32 %s77, 1
      %s79 = scalar_select %p76, %s77, %s78
      %p82 = pneg %p76
      %p83 = scmp.eq.s32.totalorder %s15, 2
      %p84 = por %p82, %p83
      %p85 = scmp.ne.s32.totalorder %s77, %s80
      %p86 = scmp.eq.s32.totalorder %s15, 0
      %p87 = por %p85, %p86
      %p88 = scmp.ne.s32.totalorder %s77, %s80
      %p89 = scmp.eq.s32.totalorder %s20, 2
      %p90 = por %p88, %p89
      %p91 = scmp.ne.s32.totalorder %s80, %s81
      %p92 = scmp.eq.s32.totalorder %s20, 0
      %p93 = por %p91, %p92
      %p94 = scmp.ne.s32.totalorder %s80, %s81
      %p95 = scmp.eq.s32.totalorder %s21, 2
      %p96 = por %p94, %p95
      %p98 = scmp.ne.s32.totalorder %s81, %s97
      %p99 = scmp.eq.s32.totalorder %s21, 0
      %p100 = por %p98, %p99
      %s101 = ssub.s32 %s15, %s22
      %p102 = scmp.eq.s32.totalorder %s101, 0
      %s104 = sadd.s32 %s103, 1
      %s105 = scalar_select %p102, %s103, %s104
      %p108 = pneg %p102
      %p109 = scmp.eq.s32.totalorder %s15, 2
      %p110 = por %p108, %p109
      %p111 = scmp.ne.s32.totalorder %s103, %s106
      %p112 = scmp.eq.s32.totalorder %s15, 0
      %p113 = por %p111, %p112
      %p114 = scmp.ne.s32.totalorder %s103, %s106
      %p115 = scmp.eq.s32.totalorder %s20, 2
      %p116 = por %p114, %p115
      %p117 = scmp.ne.s32.totalorder %s106, %s107
      %p118 = scmp.eq.s32.totalorder %s20, 0
      %p119 = por %p117, %p118
      %p120 = scmp.ne.s32.totalorder %s106, %s107
      %p121 = scmp.eq.s32.totalorder %s21, 2
      %p122 = por %p120, %p121
      %p124 = scmp.ne.s32.totalorder %s107, %s123
      %p125 = scmp.eq.s32.totalorder %s21, 0
      %p126 = por %p124, %p125
      %p127 = scmp.le.s32.totalorder 1, %s15
      %p128 = scmp.lt.s32.totalorder %s15, 4
      %p129 = pnand %p127, %p128
      %p130 = pneg %p129
      // Predicated region
      $region9: #{tpu_custom_call.1} parent=5 // pred_check
        _
      $region10: #{tpu_custom_call.1} parent=5 // pred_check_branch
        %132 = sbr.rel (%p129) target = $region12
      $region11: #{tpu_custom_call.1} parent=5 // pred_region
        %s133 = ssub.s32 %s15, 1
      $region12: #{tpu_custom_call.1} parent=5 // pred_fallthru
        _
      %p134 = scmp.lt.s32.totalorder %s15, 3
      // Predicated region
      $region13: #{tpu_custom_call.1} parent=5 // pred_check
        %p135 = pneg %p134
      $region14: #{tpu_custom_call.1} parent=5 // pred_check_branch
        %137 = sbr.rel (%p135) target = $region16
      $region15: #{tpu_custom_call.1} parent=5 // pred_region
        // Predicated region
        $region17: #{tpu_custom_call.1} parent=15 // pred_check
          %p138 = pneg %p35
        $region18: #{tpu_custom_call.1} parent=15 // pred_check_branch
          %140 = sbr.rel (%p138) target = $region20
        $region19: #{tpu_custom_call.1} parent=15 // pred_region
          %s141 = sand.u32 %s25, 1
          %s142 = scalar_lea.sflag [#allocation3], %s141
          %s143 = sand.u32 %s25, 1
          %s144 = smul.addr %s143, 8
          %s145 = scalar_lea.vmem [#allocation2], %s144
          %147 = vsyncadd %s142, 0
          %s148 = smul.addr %s15, 8
          %s149 = scalar_lea.hbm %s0, %s148
          %s151 = sshll.u32 %s149, 4
          %s152 = int_to_ptr.hbm [resolvable:$true] %s151
          %s153 = sshll.u32 %s145, 4
          %s154 = int_to_ptr.vmem [resolvable:$true] %s153
          %156 = dma.hbm_to_vmem [thread:$0]  %s152, 128, %s154, %s142
        $region20: #{tpu_custom_call.1} parent=15 // pred_fallthru
          _
        // Predicated region
        $region21: #{tpu_custom_call.1} parent=15 // pred_check
          %p157 = pneg %p61
        $region22: #{tpu_custom_call.1} parent=15 // pred_check_branch
          %159 = sbr.rel (%p157) target = $region24
        $region23: #{tpu_custom_call.1} parent=15 // pred_region
          %s160 = sand.u32 %s15, 1
          %s161 = scalar_lea.sflag [#allocation5], %s160
          %s162 = sand.u32 %s51, 1
          %s163 = smul.addr %s162, 8
          %s164 = scalar_lea.vmem [#allocation4], %s163
          %166 = vsyncadd %s161, 0
          %s167 = smul.addr %s15, 8
          %s168 = scalar_lea.hbm %s1, %s167
          %s170 = sshll.u32 %s168, 4
          %s171 = int_to_ptr.hbm [resolvable:$true] %s170
          %s172 = sshll.u32 %s164, 4
          %s173 = int_to_ptr.vmem [resolvable:$true] %s172
          %175 = dma.hbm_to_vmem [thread:$0]  %s171, 128, %s173, %s161
        $region24: #{tpu_custom_call.1} parent=15 // pred_fallthru
          _
        // Predicated region
        $region25: #{tpu_custom_call.1} parent=15 // pred_check
          %p176 = pneg %p87
        $region26: #{tpu_custom_call.1} parent=15 // pred_check_branch
          %178 = sbr.rel (%p176) target = $region28
        $region27: #{tpu_custom_call.1} parent=15 // pred_region
          %s179 = sand.u32 %s15, 1
          %s180 = scalar_lea.sflag [#allocation5], %s179
          %s181 = sand.u32 %s77, 1
          %s182 = smul.addr %s181, 8
          %s183 = scalar_lea.vmem [#allocation6], %s182
          %185 = vsyncadd %s180, 0
          %s186 = smul.addr %s15, 8
          %s187 = scalar_lea.hbm %s2, %s186
          %s189 = sshll.u32 %s187, 4
          %s190 = int_to_ptr.hbm [resolvable:$true] %s189
          %s191 = sshll.u32 %s183, 4
          %s192 = int_to_ptr.vmem [resolvable:$true] %s191
          %194 = dma.hbm_to_vmem [thread:$0]  %s190, 128, %s192, %s180
        $region28: #{tpu_custom_call.1} parent=15 // pred_fallthru
          _
      $region16: #{tpu_custom_call.1} parent=5 // pred_fallthru
        _
      %p195 = scmp.le.s32.totalorder 1, %s15
      %p196 = scmp.lt.s32.totalorder %s15, 4
      %p197 = pnand %p195, %p196
      %p198 = pneg %p197
      // Predicated region
      $region29: #{tpu_custom_call.1} parent=5 // pred_check
        _
      $region30: #{tpu_custom_call.1} parent=5 // pred_check_branch
        %200 = sbr.rel (%p197) target = $region32
      $region31: #{tpu_custom_call.1} parent=5 // pred_region
        %s201 = ssub.s32 %s15, 1
        %s202 = sand.u32 %s28, 1
        %s203 = scalar_lea.sflag [#allocation3], %s202
        %s204 = sand.u32 %s28, 1
        %s205 = smul.addr %s204, 8
        %s206 = scalar_lea.vmem [#allocation2], %s205
        // Predicated region
        $region33: #{tpu_custom_call.1} parent=31 // pred_check
          %p207 = pneg %p41
        $region34: #{tpu_custom_call.1} parent=31 // pred_check_branch
          %209 = sbr.rel (%p207) target = $region36
        $region35: #{tpu_custom_call.1} parent=31 // pred_region
          %211 = dma.done %s203, 128
        $region36: #{tpu_custom_call.1} parent=31 // pred_fallthru
          _
        %s212 = sand.u32 %s20, 1
        %s213 = scalar_lea.sflag [#allocation5], %s212
        %s214 = sand.u32 %s54, 1
        %s215 = smul.addr %s214, 8
        %s216 = scalar_lea.vmem [#allocation4], %s215
        // Predicated region
        $region37: #{tpu_custom_call.1} parent=31 // pred_check
          %p217 = pneg %p67
        $region38: #{tpu_custom_call.1} parent=31 // pred_check_branch
          %219 = sbr.rel (%p217) target = $region40
        $region39: #{tpu_custom_call.1} parent=31 // pred_region
          %221 = dma.done %s213, 128
        $region40: #{tpu_custom_call.1} parent=31 // pred_fallthru
          _
        %s222 = sand.u32 %s20, 1
        %s223 = scalar_lea.sflag [#allocation5], %s222
        %s224 = sand.u32 %s80, 1
        %s225 = smul.addr %s224, 8
        %s226 = scalar_lea.vmem [#allocation6], %s225
        // Predicated region
        $region41: #{tpu_custom_call.1} parent=31 // pred_check
          %p227 = pneg %p93
        $region42: #{tpu_custom_call.1} parent=31 // pred_check_branch
          %229 = sbr.rel (%p227) target = $region44
        $region43: #{tpu_custom_call.1} parent=31 // pred_region
          %231 = dma.done %s223, 128
        $region44: #{tpu_custom_call.1} parent=31 // pred_fallthru
          _
        %s232 = sand.u32 %s28, 1
        %s233 = scalar_lea.sflag [#allocation3], %s232
        %s234 = sand.u32 %s28, 1
        %s235 = smul.addr %s234, 8
        %s236 = scalar_lea.vmem [#allocation2], %s235
        %p237 = pneg %p41
        %p238 = pneg %p38
        %s239 = sand.u32 %s20, 1
        %s240 = scalar_lea.sflag [#allocation5], %s239
        %s241 = sand.u32 %s54, 1
        %s242 = smul.addr %s241, 8
        %s243 = scalar_lea.vmem [#allocation4], %s242
        %p244 = pneg %p67
        %p245 = pneg %p64
        %s246 = sand.u32 %s20, 1
        %s247 = scalar_lea.sflag [#allocation5], %s246
        %s248 = sand.u32 %s80, 1
        %s249 = smul.addr %s248, 8
        %s250 = scalar_lea.vmem [#allocation6], %s249
        %p251 = pneg %p93
        %p252 = pneg %p90
        %p253 = pneg %p119
        %p254 = pneg %p116
        %p255 = scmp.lt.s32.totalorder %s20, 2
        %s256 = scalar_select %p255, %s20, 2
        %s257 = smul.addr %s256, 8
        %s258 = scalar_lea.vmem %s3, %s257
        %p259 = scmp.lt.s32.totalorder %s20, 2
        %s260 = scalar_select %p259, %s20, 2
        %s261 = smul.addr %s260, 8
        %s262 = scalar_lea.vmem %s3, %s261
        %v263 = vld [vmem:[%s206] sm:$0xff]
        %v264 = vld [vmem:[%s216] sm:$0xff]
        %v265 = vld [vmem:[%s226] sm:$0xff]
        %v266 = vsub.f32 %v264, %v265
        %v267 = vadd.f32 %v264, %v265
        %v268 = vmul.f32 %v263, 2.0
        %v269 = vsub.f32 %v267, %v268
        %v270 = vmul.f32 %v266, %v269
        %271 = vmatpush.msra.mxu0 1.0
        %272 = vmatpush.msra.mxu0 1.0
        %273 = vmatpush.msra.mxu0 1.0
        %274 = vmatpush.msra.mxu0 1.0
        %275 = vmatpush.msra.mxu0 1.0
        %276 = vmatpush.msra.mxu0 1.0
        %277 = vmatpush.msra.mxu0 1.0
        %278 = vmatpush.msra.mxu0 1.0
        %279 = vmatpush.msra.mxu0 1.0
        %280 = vmatpush.msra.mxu0 1.0
        %281 = vmatpush.msra.mxu0 1.0
        %282 = vmatpush.msra.mxu0 1.0
        %283 = vmatpush.msra.mxu0 1.0
        %284 = vmatpush.msra.mxu0 1.0
        %285 = vmatpush.msra.mxu0 1.0
        %286 = vmatpush.msra.mxu0 1.0
        %v287 = vand.u32 %v270, 4294901760
        %v288 = vsub.f32 %v270, %v287
        %v289 = vand.u32 %v288, 4294901760
        %v290 = vsub.f32 %v288, %v289
        %v291 = vand.u32 %v290, 4294901760
        %292 = vmatmul.f32.gmra.mxu0 %v291
        %v293 = vpop.f32.mrf.mxu0
        %v294 = vadd.f32 0.5, %v293
        %295 = vdwg.mxu0
        %296 = vmatpush.msra.mxu0 0.0
        %297 = vmatpush.msra.mxu0 0.0
        %298 = vmatpush.msra.mxu0 0.0
        %299 = vmatpush.msra.mxu0 0.0
        %300 = vmatpush.msra.mxu0 0.0
        %301 = vmatpush.msra.mxu0 0.0
        %302 = vmatpush.msra.mxu0 0.0
        %303 = vmatpush.msra.mxu0 0.0
        %304 = vmatpush.msra.mxu0 0.0
        %305 = vmatpush.msra.mxu0 0.0
        %306 = vmatpush.msra.mxu0 0.0
        %307 = vmatpush.msra.mxu0 0.0
        %308 = vmatpush.msra.mxu0 0.0
        %309 = vmatpush.msra.mxu0 0.0
        %310 = vmatpush.msra.mxu0 0.0
        %311 = vmatpush.msra.mxu0 0.0
        %v312 = vand.u32 %v270, 4294901760
        %313 = vmatmul.f32.gmra.mxu0 %v312
        %v314 = vpop.f32.mrf.mxu0
        %v315 = vadd.f32 %v294, %v314
        %316 = vdwg.mxu0
        %317 = vmatpush.msra.mxu0 0.0
        %318 = vmatpush.msra.mxu0 0.0
        %319 = vmatpush.msra.mxu0 0.0
        %320 = vmatpush.msra.mxu0 0.0
        %321 = vmatpush.msra.mxu0 0.0
        %322 = vmatpush.msra.mxu0 0.0
        %323 = vmatpush.msra.mxu0 0.0
        %324 = vmatpush.msra.mxu0 0.0
        %325 = vmatpush.msra.mxu0 0.0
        %326 = vmatpush.msra.mxu0 0.0
        %327 = vmatpush.msra.mxu0 0.0
        %328 = vmatpush.msra.mxu0 0.0
        %329 = vmatpush.msra.mxu0 0.0
        %330 = vmatpush.msra.mxu0 0.0
        %331 = vmatpush.msra.mxu0 0.0
        %332 = vmatpush.msra.mxu0 0.0
        %v333 = vand.u32 %v270, 4294901760
        %v334 = vsub.f32 %v270, %v333
        %335 = vmatmul.f32.gmra.mxu0 %v334
        %v336 = vpop.f32.mrf.mxu0
        %v337 = vadd.f32 %v315, %v336
        %338 = vdwg.mxu0
        %339 = vmatpush.msra.mxu0 1.0
        %340 = vmatpush.msra.mxu0 1.0
        %341 = vmatpush.msra.mxu0 1.0
        %342 = vmatpush.msra.mxu0 1.0
        %343 = vmatpush.msra.mxu0 1.0
        %344 = vmatpush.msra.mxu0 1.0
        %345 = vmatpush.msra.mxu0 1.0
        %346 = vmatpush.msra.mxu0 1.0
        %347 = vmatpush.msra.mxu0 1.0
        %348 = vmatpush.msra.mxu0 1.0
        %349 = vmatpush.msra.mxu0 1.0
        %350 = vmatpush.msra.mxu0 1.0
        %351 = vmatpush.msra.mxu0 1.0
        %352 = vmatpush.msra.mxu0 1.0
        %353 = vmatpush.msra.mxu0 1.0
        %354 = vmatpush.msra.mxu0 1.0
        %v355 = vand.u32 %v270, 4294901760
        %v356 = vsub.f32 %v270, %v355
        %v357 = vand.u32 %v356, 4294901760
        %358 = vmatmul.f32.gmra.mxu0 %v357
        %v359 = vpop.f32.mrf.mxu0
        %v360 = vadd.f32 %v337, %v359
        %361 = vdwg.mxu0
        %362 = vmatpush.msra.mxu0 0.0
        %363 = vmatpush.msra.mxu0 0.0
        %364 = vmatpush.msra.mxu0 0.0
        %365 = vmatpush.msra.mxu0 0.0
        %366 = vmatpush.msra.mxu0 0.0
        %367 = vmatpush.msra.mxu0 0.0
        %368 = vmatpush.msra.mxu0 0.0
        %369 = vmatpush.msra.mxu0 0.0
        %370 = vmatpush.msra.mxu0 0.0
        %371 = vmatpush.msra.mxu0 0.0
        %372 = vmatpush.msra.mxu0 0.0
        %373 = vmatpush.msra.mxu0 0.0
        %374 = vmatpush.msra.mxu0 0.0
        %375 = vmatpush.msra.mxu0 0.0
        %376 = vmatpush.msra.mxu0 0.0
        %377 = vmatpush.msra.mxu0 0.0
        %v378 = vand.u32 %v270, 4294901760
        %379 = vmatmul.f32.gmra.mxu0 %v378
        %v380 = vpop.f32.mrf.mxu0
        %v381 = vadd.f32 %v360, %v380
        %382 = vdwg.mxu0
        %383 = vmatpush.msra.mxu0 1.0
        %384 = vmatpush.msra.mxu0 1.0
        %385 = vmatpush.msra.mxu0 1.0
        %386 = vmatpush.msra.mxu0 1.0
        %387 = vmatpush.msra.mxu0 1.0
        %388 = vmatpush.msra.mxu0 1.0
        %389 = vmatpush.msra.mxu0 1.0
        %390 = vmatpush.msra.mxu0 1.0
        %391 = vmatpush.msra.mxu0 1.0
        %392 = vmatpush.msra.mxu0 1.0
        %393 = vmatpush.msra.mxu0 1.0
        %394 = vmatpush.msra.mxu0 1.0
        %395 = vmatpush.msra.mxu0 1.0
        %396 = vmatpush.msra.mxu0 1.0
        %397 = vmatpush.msra.mxu0 1.0
        %398 = vmatpush.msra.mxu0 1.0
        %v399 = vand.u32 %v270, 4294901760
        %400 = vmatmul.f32.gmra.mxu0 %v399
        %v401 = vpop.f32.mrf.mxu0
        %v402 = vadd.f32 %v381, %v401
        %403 = vdwg.mxu0
        %v404 = vmax.f32 %v402, 0.0
        %vm405 = vcmask 7168
        %406 = vst.msk [vmem:[%s262] sm:$0xff] %vm405, %v404
        %p407 = scmp.lt.s32.totalorder %s20, 2
        %s408 = scalar_select %p407, %s20, 2
        %s409 = smul.addr %s408, 8
        %s410 = scalar_lea.vmem %s3, %s409
        // Predicated region
        $region45: #{tpu_custom_call.1} parent=31 // pred_check
          %p411 = pneg %p116
        $region46: #{tpu_custom_call.1} parent=31 // pred_check_branch
          %413 = sbr.rel (%p411) target = $region48
        $region47: #{tpu_custom_call.1} parent=31 // pred_region
          _
        $region48: #{tpu_custom_call.1} parent=31 // pred_fallthru
          _
      $region32: #{tpu_custom_call.1} parent=5 // pred_fallthru
        _
      %p414 = scmp.le.s32.totalorder 2, %s15
      // Predicated region
      $region49: #{tpu_custom_call.1} parent=5 // pred_check
        %p415 = pneg %p414
      $region50: #{tpu_custom_call.1} parent=5 // pred_check_branch
        %417 = sbr.rel (%p415) target = $region52
      $region51: #{tpu_custom_call.1} parent=5 // pred_region
        %s418 = ssub.s32 %s15, 2
        // Predicated region
        $region53: #{tpu_custom_call.1} parent=51 // pred_check
          %p419 = pneg %p122
        $region54: #{tpu_custom_call.1} parent=51 // pred_check_branch
          %421 = sbr.rel (%p419) target = $region56
        $region55: #{tpu_custom_call.1} parent=51 // pred_region
          %p422 = scmp.lt.s32.totalorder %s21, 2
          %s423 = scalar_select %p422, %s21, 2
          %s424 = smul.addr %s423, 8
          %s425 = scalar_lea.vmem %s3, %s424
        $region56: #{tpu_custom_call.1} parent=51 // pred_fallthru
          _
      $region52: #{tpu_custom_call.1} parent=5 // pred_fallthru
        _
    $region6: #{tpu_custom_call.1} parent=1 // loop_footer
      %s19 = sadd.s32 1, %s15
    $region7: #{tpu_custom_call.1} parent=1 // loop_footer_branch
      %14 = sbr.rel target = $region3
    $region8: #{tpu_custom_call.1} parent=1 // loop_exit
      _
    %426 = vsyncpa [#allocation3], 1
    %s427 = scalar_lea.sflag [#allocation3], 1
    %428 = vsyncpa %s427, 1
    %429 = vsyncpa [#allocation5], 1
    %s430 = scalar_lea.sflag [#allocation5], 1
    %431 = vsyncpa %s430, 1

</llo_original>
